<compile_context>
chip_gen: v5e
topology: v5e:2x2
jax: 0.10.0
libtpu: 0.0.40
codegen_flags: <defaults>
</compile_context>

<pallas_src>
import jax
import jax.numpy as jnp
from jax.experimental import pallas as pl
from jax.experimental.pallas import tpu as pltpu

BN_EPS = 1e-5


def _round_up(a, b):
    return (a + b - 1) // b * b


# ----------------------------------------------------------------------------- kernel
def _resblock_kernel(x_ref, w1_ref, b1_ref, w2_ref, b2_ref, o_ref, acc_ref):
    """Grid = (row_tiles, k_tiles).  acc_ref is an f32 (tm, Hp) accumulator."""
    k = pl.program_id(1)

    @pl.when(k == 0)
    def _():
        acc_ref[...] = jnp.zeros_like(acc_ref)

    # Matmuls run in the weight dtype (bf16 in production, f32 for exactness tests);
    # accumulation is always f32 via preferred_element_type.
    xm = x_ref[...].astype(w1_ref.dtype)                                   # (tm, Hp)
    h = jnp.dot(xm, w1_ref[...], preferred_element_type=jnp.float32)       # (tm, tk4)
    h = jnp.maximum(h + b1_ref[...], 0.0)                                  # bias + ReLU per K-chunk
    # Dropout: eval mode -> identity.
    acc_ref[...] += jnp.dot(h.astype(w2_ref.dtype), w2_ref[...],
                            preferred_element_type=jnp.float32)            # (tm, Hp)

    @pl.when(k == pl.num_programs(1) - 1)
    def _():
        # residual add in f32 on the un-cast x tile
        o_ref[...] = (x_ref[...].astype(jnp.float32) + acc_ref[...] + b2_ref[...]).astype(o_ref.dtype)


# ----------------------------------------------------------------------------- param prep (once)
def prepare_params(params, *, block_rows=256, block_k=512, matmul_dtype=jnp.bfloat16):
    """Fold eval-mode BN into fc1, pre-transpose weights, zero-pad to lane-aligned shapes."""
    H = params["bn_weight"].shape[0]
    H4 = 4 * H
    Hp = _round_up(H, 128)
    tk4 = _round_up(min(block_k, H4), 128)
    H4p = _round_up(H4, tk4)

    scale = params["bn_weight"] * jax.lax.rsqrt(params["bn_running_var"] + BN_EPS)   # (H,)
    shift = params["bn_bias"] - params["bn_running_mean"] * scale                    # (H,)

    w1t = params["fc1_weight"].T                       # (H, 4H)   (PyTorch weight is (4H, H))
    w1_eff = w1t * scale[:, None]                      # BN scale folded into fc1
    b1_eff = params["fc1_bias"] + shift @ w1t          # BN shift folded into fc1 bias
    w2t = params["fc2_weight"].T                       # (4H, H)

    # zero-padding is exact: padded inputs/weights/biases contribute 0 everywhere.
    w1_p = jnp.zeros((Hp, H4p), jnp.float32).at[:H, :H4].set(w1_eff).astype(matmul_dtype)
    b1_p = jnp.zeros((1, H4p), jnp.float32).at[0, :H4].set(b1_eff)
    w2_p = jnp.zeros((H4p, Hp), jnp.float32).at[:H4, :H].set(w2t).astype(matmul_dtype)
    b2_p = jnp.zeros((1, Hp), jnp.float32).at[0, :H].set(params["fc2_bias"])

    return dict(w1=w1_p, b1=b1_p, w2=w2_p, b2=b2_p,
                H=H, Hp=Hp, H4p=H4p, tk4=tk4, block_rows=block_rows)


# ----------------------------------------------------------------------------- wrapper
def residual_block_forward(x, prep):
    """x: (N, H).  prep: output of prepare_params."""
    N, H = x.shape
    assert H == prep["H"]
    Hp, H4p, tk4 = prep["Hp"], prep["H4p"], prep["tk4"]

    tm = _round_up(min(prep["block_rows"], N), 8)          # row tile: multiple of 8 sublanes
    Np = _round_up(N, tm)                                   # pad rows (pl.cdiv-equivalent, no drop)
    x_p = jnp.pad(x.astype(jnp.float32), ((0, Np - N), (0, Hp - H)))

    grid = (Np // tm, H4p // tk4)                           # rows parallel, K reduction last
    w_isz = jnp.dtype(prep["w1"].dtype).itemsize

    # VMEM estimate: double-buffered x / weights / biases / out + f32 accumulator.
    est_vmem = (2 * tm * Hp * 4
                + 2 * (Hp * tk4 + tk4 * Hp) * w_isz
                + 2 * (tk4 + Hp) * 4
                + tm * Hp * 4
                + 2 * tm * Hp * 4)
    vmem_limit = int(min(48 * 2**20, max(16 * 2**20, 2 * est_vmem)))

    flops = 4 * Np * Hp * H4p                               # two matmuls
    bytes_accessed = int(2 * Np * Hp * 4                    # x in + out
                         + grid[0] * ((Hp * H4p + H4p * Hp) * w_isz + H4p * 4 + Hp * 4))

    out = pl.pallas_call(
        _resblock_kernel,
        out_shape=jax.ShapeDtypeStruct((Np, Hp), x.dtype),
        grid_spec=pltpu.PrefetchScalarGridSpec(
            num_scalar_prefetch=0,
            grid=grid,
            in_specs=[
                pl.BlockSpec((tm, Hp), lambda i, k: (i, 0)),    # x row tile (revisited over k)
                pl.BlockSpec((Hp, tk4), lambda i, k: (0, k)),   # W1_eff K-chunk
                pl.BlockSpec((1, tk4), lambda i, k: (0, k)),    # b1_eff K-chunk
                pl.BlockSpec((tk4, Hp), lambda i, k: (k, 0)),   # W2^T K-chunk
                pl.BlockSpec((1, Hp), lambda i, k: (0, 0)),     # b2
            ],
            out_specs=pl.BlockSpec((tm, Hp), lambda i, k: (i, 0)),
            scratch_shapes=[pltpu.VMEM((tm, Hp), jnp.float32)],
        ),
        compiler_params=pltpu.CompilerParams(
            dimension_semantics=("parallel", "arbitrary"),
            vmem_limit_bytes=vmem_limit,
        ),
        cost_estimate=pl.CostEstimate(flops=flops, transcendentals=0,
                                      bytes_accessed=bytes_accessed),
    )(x_p, prep["w1"], prep["b1"], prep["w2"], prep["b2"])

    return out[:N, :H]


# ----------------------------------------------------------------------------- test harness
def init_params(key, hidden_size):
    """Deterministic synthetic parameters with the shapes nn.Module.__init__ implies."""
    H, H4 = hidden_size, 4 * hidden_size
    ks = jax.random.split(key, 8)
    return {
        "bn_weight": 1.0 + 0.1 * jax.random.normal(ks[0], (H,), jnp.float32),
        "bn_bias": 0.1 * jax.random.normal(ks[1], (H,), jnp.float32),
        "bn_running_mean": 0.05 * jax.random.normal(ks[2], (H,), jnp.float32),
        "bn_running_var": 1.0 + 0.1 * jax.random.uniform(ks[3], (H,), jnp.float32),
        "fc1_weight": (1.0 / jnp.sqrt(H)) * jax.random.normal(ks[4], (H4, H), jnp.float32),
        "fc1_bias": 0.01 * jax.random.normal(ks[5], (H4,), jnp.float32),
        "fc2_weight": (1.0 / jnp.sqrt(H4)) * jax.random.normal(ks[6], (H, H4), jnp.float32),
        "fc2_bias": 0.01 * jax.random.normal(ks[7], (H,), jnp.float32),
    }


def reference_forward(x, params):
    """Pure-JAX reference (eval-mode PyTorch semantics)."""
    gamma, beta = params["bn_weight"], params["bn_bias"]
    mean, var = params["bn_running_mean"], params["bn_running_var"]
    xn = (x - mean) / jnp.sqrt(var + BN_EPS) * gamma + beta
    h = jnp.maximum(xn @ params["fc1_weight"].T + params["fc1_bias"], 0.0)
    y = h @ params["fc2_weight"].T + params["fc2_bias"]
    return x + y


if __name__ == "__main__":
    # batch=8, hidden_size=32 (dropout_p irrelevant in eval mode)
    N, H = 8, 32
    key = jax.random.PRNGKey(0)
    kx, kp = jax.random.split(key)
    x = jax.random.normal(kx, (N, H), jnp.float32)
    params = init_params(kp, H)
    ref = reference_forward(x, params)

    # 1) f32-MXU path: validates BN folding, K-tiling accumulator, padding (tight tolerance).
    prep_f32 = prepare_params(params, matmul_dtype=jnp.float32)
    out_f32 = jax.block_until_ready(residual_block_forward(x, prep_f32))
    assert out_f32.shape == (N, H) and out_f32.dtype == jnp.float32
    assert jnp.allclose(out_f32, ref, atol=1e-4, rtol=1e-4), "f32 Pallas kernel mismatch vs reference"

    # 2) bf16-MXU path (production dtype; accumulation/residual in f32) — looser tolerance.
    prep_bf16 = prepare_params(params, matmul_dtype=jnp.bfloat16)
    out_bf16 = jax.block_until_ready(residual_block_forward(x, prep_bf16))
    assert jnp.allclose(out_bf16, ref, atol=5e-2, rtol=5e-2), "bf16 Pallas kernel mismatch vs reference"

    # 3) non-aligned batch / hidden size exercises row+lane padding paths.
    N2, H2 = 13, 48
    kx2, kp2 = jax.random.split(jax.random.PRNGKey(1))
    x2 = jax.random.normal(kx2, (N2, H2), jnp.float32)
    params2 = init_params(kp2, H2)
    out2 = jax.block_until_ready(residual_block_forward(x2, prepare_params(params2)))
    assert out2.shape == (N2, H2)
    assert jnp.allclose(out2, reference_forward(x2, params2), atol=5e-2, rtol=5e-2), \
        "padded-shape Pallas kernel mismatch vs reference"

    print("KERNEL_OK")
</pallas_src>

<mosaic_0001>
module attributes {stable_mosaic.version = 11 : i64} {
  func.func @_resblock_kernel(%arg0: i32, %arg1: i32, %arg2: memref<8x128xf32, #tpu.memory_space<vmem>>, %arg3: memref<128x128xf32, #tpu.memory_space<vmem>>, %arg4: memref<1x128xf32, #tpu.memory_space<vmem>>, %arg5: memref<128x128xf32, #tpu.memory_space<vmem>>, %arg6: memref<1x128xf32, #tpu.memory_space<vmem>>, %arg7: memref<8x128xf32, #tpu.memory_space<vmem>>, %arg8: memref<8x128xf32, #tpu.memory_space<vmem>>) attributes {dimension_semantics = [#tpu.dimension_semantics<parallel>, #tpu.dimension_semantics<arbitrary>], iteration_bounds = array<i64: 1, 1>, scalar_prefetch = 0 : i64, scratch_operands = 1 : i64, tpu.core_type = #tpu.core_type<tc>, window_params = [{transform_indices = @transform_0, window_bounds = array<i64: 8, 128>}, {transform_indices = @transform_1, window_bounds = array<i64: 128, 128>}, {transform_indices = @transform_2, window_bounds = array<i64: 1, 128>}, {transform_indices = @transform_3, window_bounds = array<i64: 128, 128>}, {pipeline_mode = #tpu.pipeline_mode<synchronous>, transform_indices = @transform_4, window_bounds = array<i64: 1, 128>}, {transform_indices = @transform_5, window_bounds = array<i64: 8, 128>}]} {
    %c0_i32 = arith.constant 0 : i32
    %0 = arith.cmpi eq, %arg1, %c0_i32 : i32
    %1 = arith.extui %0 : i1 to i32
    %c0_i32_0 = arith.constant 0 : i32
    %2 = arith.cmpi ne, %1, %c0_i32_0 : i32
    scf.if %2 {
      %cst_16 = arith.constant 0.000000e+00 : f32
      %19 = vector.broadcast %cst_16 : f32 to vector<8x128xf32>
      %c0_17 = arith.constant 0 : index
      %c0_18 = arith.constant 0 : index
      %20 = vector.load %arg8[%c0_17, %c0_18] : memref<8x128xf32, #tpu.memory_space<vmem>>, vector<8x128xf32>
      tpu.vector_store %arg8[%c0_17, %c0_18], %19 {strides = array<i32>} : memref<8x128xf32, #tpu.memory_space<vmem>>, vector<8x128xf32>,
    } else {
    }
    %c0 = arith.constant 0 : index
    %c0_1 = arith.constant 0 : index
    %3 = vector.load %arg2[%c0, %c0_1] : memref<8x128xf32, #tpu.memory_space<vmem>>, vector<8x128xf32>
    %c0_2 = arith.constant 0 : index
    %c0_3 = arith.constant 0 : index
    %4 = vector.load %arg3[%c0_2, %c0_3] : memref<128x128xf32, #tpu.memory_space<vmem>>, vector<128x128xf32>
    %cst = arith.constant dense<0.000000e+00> : vector<8x128xf32>
    %5 = tpu.matmul %3, %4, %cst {dimension_numbers = #tpu.dot_dimension_numbers<[1], [0], [0], [1], [0, 0, 1, 1], [], []>} : vector<8x128xf32>, vector<128x128xf32>, vector<8x128xf32> -> vector<8x128xf32>
    %c0_4 = arith.constant 0 : index
    %c0_5 = arith.constant 0 : index
    %6 = vector.load %arg4[%c0_4, %c0_5] : memref<1x128xf32, #tpu.memory_space<vmem>>, vector<1x128xf32>
    %7 = vector.broadcast %6 : vector<1x128xf32> to vector<8x128xf32>
    %8 = arith.addf %5, %7 : vector<8x128xf32>
    %cst_6 = arith.constant 0.000000e+00 : f32
    %9 = vector.broadcast %cst_6 : f32 to vector<8x128xf32>
    %10 = arith.maximumf %8, %9 : vector<8x128xf32>
    %c0_7 = arith.constant 0 : index
    %c0_8 = arith.constant 0 : index
    %11 = vector.load %arg8[%c0_7, %c0_8] : memref<8x128xf32, #tpu.memory_space<vmem>>, vector<8x128xf32>
    %c0_9 = arith.constant 0 : index
    %c0_10 = arith.constant 0 : index
    %12 = vector.load %arg5[%c0_9, %c0_10] : memref<128x128xf32, #tpu.memory_space<vmem>>, vector<128x128xf32>
    %cst_11 = arith.constant dense<0.000000e+00> : vector<8x128xf32>
    %13 = tpu.matmul %10, %12, %cst_11 {dimension_numbers = #tpu.dot_dimension_numbers<[1], [0], [0], [1], [0, 0, 1, 1], [], []>} : vector<8x128xf32>, vector<128x128xf32>, vector<8x128xf32> -> vector<8x128xf32>
    %14 = arith.addf %11, %13 : vector<8x128xf32>
    %c0_12 = arith.constant 0 : index
    %c0_13 = arith.constant 0 : index
    %15 = vector.load %arg8[%c0_12, %c0_13] : memref<8x128xf32, #tpu.memory_space<vmem>>, vector<8x128xf32>
    tpu.vector_store %arg8[%c0_12, %c0_13], %14 {strides = array<i32>} : memref<8x128xf32, #tpu.memory_space<vmem>>, vector<8x128xf32>,
    %c0_i32_14 = arith.constant 0 : i32
    %16 = arith.cmpi eq, %arg1, %c0_i32_14 : i32
    %17 = arith.extui %16 : i1 to i32
    %c0_i32_15 = arith.constant 0 : i32
    %18 = arith.cmpi ne, %17, %c0_i32_15 : i32
    scf.if %18 {
      %c0_16 = arith.constant 0 : index
      %c0_17 = arith.constant 0 : index
      %19 = vector.load %arg2[%c0_16, %c0_17] : memref<8x128xf32, #tpu.memory_space<vmem>>, vector<8x128xf32>
      %c0_18 = arith.constant 0 : index
      %c0_19 = arith.constant 0 : index
      %20 = vector.load %arg8[%c0_18, %c0_19] : memref<8x128xf32, #tpu.memory_space<vmem>>, vector<8x128xf32>
      %21 = arith.addf %19, %20 : vector<8x128xf32>
      %c0_20 = arith.constant 0 : index
      %c0_21 = arith.constant 0 : index
      %22 = vector.load %arg6[%c0_20, %c0_21] : memref<1x128xf32, #tpu.memory_space<vmem>>, vector<1x128xf32>
      %23 = vector.broadcast %22 : vector<1x128xf32> to vector<8x128xf32>
      %24 = arith.addf %21, %23 : vector<8x128xf32>
      %c0_22 = arith.constant 0 : index
      %c0_23 = arith.constant 0 : index
      %25 = vector.load %arg7[%c0_22, %c0_23] : memref<8x128xf32, #tpu.memory_space<vmem>>, vector<8x128xf32>
      tpu.vector_store %arg7[%c0_22, %c0_23], %24 {strides = array<i32>} : memref<8x128xf32, #tpu.memory_space<vmem>>, vector<8x128xf32>,
    } else {
    }
    return
  }
  func.func @transform_0(%arg0: i32, %arg1: i32) -> (i32, i32) {
    %c0_i32 = arith.constant 0 : i32
    %c0_i32_0 = arith.constant 0 : i32
    return %arg0, %c0_i32 : i32, i32
  }
  func.func @transform_1(%arg0: i32, %arg1: i32) -> (i32, i32) {
    %c0_i32 = arith.constant 0 : i32
    %c0_i32_0 = arith.constant 0 : i32
    return %c0_i32, %arg1 : i32, i32
  }
  func.func @transform_2(%arg0: i32, %arg1: i32) -> (i32, i32) {
    %c0_i32 = arith.constant 0 : i32
    %c0_i32_0 = arith.constant 0 : i32
    return %c0_i32, %arg1 : i32, i32
  }
  func.func @transform_3(%arg0: i32, %arg1: i32) -> (i32, i32) {
    %c0_i32 = arith.constant 0 : i32
    %c0_i32_0 = arith.constant 0 : i32
    return %arg1, %c0_i32 : i32, i32
  }
  func.func @transform_4(%arg0: i32, %arg1: i32) -> (i32, i32) {
    %c0_i32 = arith.constant 0 : i32
    %c0_i32_0 = arith.constant 0 : i32
    %c0_i32_1 = arith.constant 0 : i32
    return %c0_i32, %c0_i32_0 : i32, i32
  }
  func.func @transform_5(%arg0: i32, %arg1: i32) -> (i32, i32) {
    %c0_i32 = arith.constant 0 : i32
    %c0_i32_0 = arith.constant 0 : i32
    return %arg0, %c0_i32 : i32, i32
  }
}

</mosaic_0001>

<llo_original>
// kernel: tpu_custom_call.1
$region0: #{tpu_custom_call.1}
  #allocation0 [shape = 'u32[]', space=smem, size = 0x4, offset = 0x4, fixed_abs, tag = 'smem constant byte address 0x4 - core index']
  #allocation1 [shape = 'u32[72,128]{1,0:T(1,128)}', space=vmem, size = 0x9000, scoped, tag = 'internal scratch']
  #allocation2 [shape = 'f32[8,128]{1,0:T(8,128)}', space=vmem, size = 0x1000, scoped, tag = 'scratch operand']
  %s0 = inlined_call_operand.hbm [shape: f32[8,128], index: 0, kind: input, shape index: {}]
  %s1 = inlined_call_operand.hbm [shape: f32[128,128], index: 1, kind: input, shape index: {}]
  %s2 = inlined_call_operand.vmem [shape: f32[1,128], index: 2, kind: input, shape index: {}]
  %s3 = inlined_call_operand.hbm [shape: f32[128,128], index: 3, kind: input, shape index: {}]
  %s4 = inlined_call_operand.vmem [shape: f32[1,128], index: 4, kind: input, shape index: {}]
  %s5 = inlined_call_operand.hbm [shape: f32[8,128], index: 5, kind: output, shape index: {}]
  %s6 = sld [smem:[#allocation0]]
  $region50: #{tpu_custom_call.1} parent=0
    _
  %s8 = ssub.s32 1, %s6
  %s9 = scalar_select 0, %s8, %s6
  $region1: #{tpu_custom_call.1} parent=0
    #allocation3 [shape = 'u8[4096]{0}', space=vmem, size = 0x1000, scoped, tag = 'input window, operand 0, single buffered']
    #allocation4 [shape = 's32[1]{0}', space=sflag, size = 0x4, scoped, tag = 'scoped memory for tpu_custom_call.1']
    #allocation5 [shape = 's32[1]{0}', space=sflag, size = 0x4, scoped, tag = 'scoped memory for tpu_custom_call.1']
    #allocation6 [shape = 'u8[65536]{0}', space=vmem, size = 0x10000, scoped, tag = 'input window, operand 1, single buffered']
    #allocation7 [shape = 's32[1]{0}', space=sflag, size = 0x4, scoped, tag = 'scoped memory for tpu_custom_call.1']
    #allocation8 [shape = 'u8[65536]{0}', space=vmem, size = 0x10000, scoped, tag = 'input window, operand 3, single buffered']
    #allocation9 [shape = 'u8[4096]{0}', space=vmem, size = 0x1000, scoped, tag = 'output window, operand 0, single buffered']
    %10 = vsyncpa [#allocation4], 0
    %11 = vsyncpa [#allocation7], 0
    %12 = vsyncpa [#allocation5], 0
    // Predicated region
    $region2: #{tpu_custom_call.1} parent=1 // pred_check
      _
    $region3: #{tpu_custom_call.1} parent=1 // pred_check_branch
      %14 = sbr.rel (0) target = $region5
    $region4: #{tpu_custom_call.1} parent=1 // pred_region
      %16 = vsyncadd [#allocation4], 0
      %s18 = sshll.u32 %s0, 4
      %s19 = int_to_ptr.hbm [resolvable:$true] %s18
      %s20 = sshll.u32 [#allocation3], 4
      %s21 = int_to_ptr.vmem [resolvable:$true] %s20
      %23 = dma.hbm_to_vmem [thread:$0]  %s19, 128, %s21, [#allocation4]
    $region5: #{tpu_custom_call.1} parent=1 // pred_fallthru
      _
    // Predicated region
    $region6: #{tpu_custom_call.1} parent=1 // pred_check
      _
    $region7: #{tpu_custom_call.1} parent=1 // pred_check_branch
      %25 = sbr.rel (0) target = $region9
    $region8: #{tpu_custom_call.1} parent=1 // pred_region
      %27 = vsyncadd [#allocation7], 0
      %s28 = sshll.u32 %s1, 4
      %s29 = int_to_ptr.hbm [resolvable:$true] %s28
      %s30 = sshll.u32 [#allocation6], 4
      %s31 = int_to_ptr.vmem [resolvable:$true] %s30
      %36 = dma.hbm_to_vmem [thread:$0]  %s29, 2048, %s31, [#allocation7], 128, 128, 8
    $region9: #{tpu_custom_call.1} parent=1 // pred_fallthru
      _
    // Predicated region
    $region10: #{tpu_custom_call.1} parent=1 // pred_check
      _
    $region11: #{tpu_custom_call.1} parent=1 // pred_check_branch
      %38 = sbr.rel (0) target = $region13
    $region12: #{tpu_custom_call.1} parent=1 // pred_region
      _
    $region13: #{tpu_custom_call.1} parent=1 // pred_fallthru
      _
    // Predicated region
    $region14: #{tpu_custom_call.1} parent=1 // pred_check
      _
    $region15: #{tpu_custom_call.1} parent=1 // pred_check_branch
      %40 = sbr.rel (0) target = $region17
    $region16: #{tpu_custom_call.1} parent=1 // pred_region
      %42 = vsyncadd [#allocation7], 0
      %s43 = sshll.u32 %s3, 4
      %s44 = int_to_ptr.hbm [resolvable:$true] %s43
      %s45 = sshll.u32 [#allocation8], 4
      %s46 = int_to_ptr.vmem [resolvable:$true] %s45
      %51 = dma.hbm_to_vmem [thread:$0]  %s44, 2048, %s46, [#allocation7], 128, 128, 8
    $region17: #{tpu_custom_call.1} parent=1 // pred_fallthru
      _
    // Predicated region
    $region18: #{tpu_custom_call.1} parent=1 // pred_check
      _
    $region19: #{tpu_custom_call.1} parent=1 // pred_check_branch
      %53 = sbr.rel (0) target = $region21
    $region20: #{tpu_custom_call.1} parent=1 // pred_region
      _
    $region21: #{tpu_custom_call.1} parent=1 // pred_fallthru
      _
    // Predicated region
    $region22: #{tpu_custom_call.1} parent=1 // pred_check
      _
    $region23: #{tpu_custom_call.1} parent=1 // pred_check_branch
      %55 = sbr.rel (0) target = $region25
    $region24: #{tpu_custom_call.1} parent=1 // pred_region
      %57 = dma.done [#allocation4], 128
    $region25: #{tpu_custom_call.1} parent=1 // pred_fallthru
      _
    // Predicated region
    $region26: #{tpu_custom_call.1} parent=1 // pred_check
      _
    $region27: #{tpu_custom_call.1} parent=1 // pred_check_branch
      %59 = sbr.rel (0) target = $region29
    $region28: #{tpu_custom_call.1} parent=1 // pred_region
      %61 = dma.done [#allocation7], 2048
    $region29: #{tpu_custom_call.1} parent=1 // pred_fallthru
      _
    // Predicated region
    $region30: #{tpu_custom_call.1} parent=1 // pred_check
      _
    $region31: #{tpu_custom_call.1} parent=1 // pred_check_branch
      %63 = sbr.rel (0) target = $region33
    $region32: #{tpu_custom_call.1} parent=1 // pred_region
      %65 = dma.done [#allocation7], 2048
    $region33: #{tpu_custom_call.1} parent=1 // pred_fallthru
      _
    %p66 = scmp.eq.s32.totalorder 0, 0
    // Predicated region
    $region34: #{tpu_custom_call.1} parent=1 // pred_check
      %p67 = pneg %p66
    $region35: #{tpu_custom_call.1} parent=1 // pred_check_branch
      %69 = sbr.rel (%p67) target = $region37
    $region36: #{tpu_custom_call.1} parent=1 // pred_region
      %70 = vst [vmem:[#allocation2] sm:$0xff] 0.0
    $region37: #{tpu_custom_call.1} parent=1 // pred_fallthru
      _
    %v71 = vld [vmem:[#allocation3] sm:$0xff]
    %v72 = vld [vmem:[#allocation6] sm:$0xff]
    %v73 = vld [vmem:[#allocation6 + $0x8] sm:$0xff]
    %v74 = vld [vmem:[#allocation6 + $0x10] sm:$0xff]
    %v75 = vld [vmem:[#allocation6 + $0x18] sm:$0xff]
    %v76 = vld [vmem:[#allocation6 + $0x20] sm:$0xff]
    %v77 = vld [vmem:[#allocation6 + $0x28] sm:$0xff]
    %v78 = vld [vmem:[#allocation6 + $0x30] sm:$0xff]
    %v79 = vld [vmem:[#allocation6 + $0x38] sm:$0xff]
    %v80 = vld [vmem:[#allocation6 + $0x40] sm:$0xff]
    %v81 = vld [vmem:[#allocation6 + $0x48] sm:$0xff]
    %v82 = vld [vmem:[#allocation6 + $0x50] sm:$0xff]
    %v83 = vld [vmem:[#allocation6 + $0x58] sm:$0xff]
    %v84 = vld [vmem:[#allocation6 + $0x60] sm:$0xff]
    %v85 = vld [vmem:[#allocation6 + $0x68] sm:$0xff]
    %v86 = vld [vmem:[#allocation6 + $0x70] sm:$0xff]
    %v87 = vld [vmem:[#allocation6 + $0x78] sm:$0xff]
    %v88 = vld [vmem:[%s2] sm:$0x1]
    %v90 = vperm.slane %v88, 0
    %92 = vmatpush.msra.mxu0 %v87
    %93 = vmatpush.msra.mxu0 %v86
    %94 = vmatpush.msra.mxu0 %v85
    %95 = vmatpush.msra.mxu0 %v84
    %96 = vmatpush.msra.mxu0 %v83
    %97 = vmatpush.msra.mxu0 %v82
    %98 = vmatpush.msra.mxu0 %v81
    %99 = vmatpush.msra.mxu0 %v80
    %100 = vmatpush.msra.mxu0 %v79
    %101 = vmatpush.msra.mxu0 %v78
    %102 = vmatpush.msra.mxu0 %v77
    %103 = vmatpush.msra.mxu0 %v76
    %104 = vmatpush.msra.mxu0 %v75
    %105 = vmatpush.msra.mxu0 %v74
    %106 = vmatpush.msra.mxu0 %v73
    %107 = vmatpush.msra.mxu0 %v72
    %108 = vmatmul.f32.gmra.mxu0 %v71
    %v109 = vpop.f32.mrf.mxu0
    %v110 = vadd.f32 %v90, %v109
    %111 = vdwg.mxu0
    %v112 = vmax.f32 %v110, 0.0
    %v113 = vld [vmem:[#allocation2] sm:$0xff]
    %v114 = vld [vmem:[#allocation8] sm:$0xff]
    %v115 = vld [vmem:[#allocation8 + $0x8] sm:$0xff]
    %v116 = vld [vmem:[#allocation8 + $0x10] sm:$0xff]
    %v117 = vld [vmem:[#allocation8 + $0x18] sm:$0xff]
    %v118 = vld [vmem:[#allocation8 + $0x20] sm:$0xff]
    %v119 = vld [vmem:[#allocation8 + $0x28] sm:$0xff]
    %v120 = vld [vmem:[#allocation8 + $0x30] sm:$0xff]
    %v121 = vld [vmem:[#allocation8 + $0x38] sm:$0xff]
    %v122 = vld [vmem:[#allocation8 + $0x40] sm:$0xff]
    %v123 = vld [vmem:[#allocation8 + $0x48] sm:$0xff]
    %v124 = vld [vmem:[#allocation8 + $0x50] sm:$0xff]
    %v125 = vld [vmem:[#allocation8 + $0x58] sm:$0xff]
    %v126 = vld [vmem:[#allocation8 + $0x60] sm:$0xff]
    %v127 = vld [vmem:[#allocation8 + $0x68] sm:$0xff]
    %v128 = vld [vmem:[#allocation8 + $0x70] sm:$0xff]
    %v129 = vld [vmem:[#allocation8 + $0x78] sm:$0xff]
    %130 = vmatpush.msra.mxu0 %v129
    %131 = vmatpush.msra.mxu0 %v128
    %132 = vmatpush.msra.mxu0 %v127
    %133 = vmatpush.msra.mxu0 %v126
    %134 = vmatpush.msra.mxu0 %v125
    %135 = vmatpush.msra.mxu0 %v124
    %136 = vmatpush.msra.mxu0 %v123
    %137 = vmatpush.msra.mxu0 %v122
    %138 = vmatpush.msra.mxu0 %v121
    %139 = vmatpush.msra.mxu0 %v120
    %140 = vmatpush.msra.mxu0 %v119
    %141 = vmatpush.msra.mxu0 %v118
    %142 = vmatpush.msra.mxu0 %v117
    %143 = vmatpush.msra.mxu0 %v116
    %144 = vmatpush.msra.mxu0 %v115
    %145 = vmatpush.msra.mxu0 %v114
    %146 = vmatmul.f32.gmra.mxu0 %v112
    %v147 = vpop.f32.mrf.mxu0
    %v148 = vadd.f32 0.0, %v147
    %149 = vdwg.mxu0
    %v150 = vadd.f32 %v113, %v148
    %151 = vst [vmem:[#allocation2] sm:$0xff] %v150
    // Predicated region
    $region38: #{tpu_custom_call.1} parent=1 // pred_check
      %p152 = pneg %p66
    $region39: #{tpu_custom_call.1} parent=1 // pred_check_branch
      %154 = sbr.rel (%p152) target = $region41
    $region40: #{tpu_custom_call.1} parent=1 // pred_region
      %v155 = vld [vmem:[#allocation3] sm:$0xff]
      %v156 = vld [vmem:[#allocation2] sm:$0xff]
      %v157 = vadd.f32 %v155, %v156
      %v158 = vld [vmem:[%s4] sm:$0x1]
      %v160 = vperm.slane %v158, 0
      %v162 = vadd.f32 %v157, %v160
      %163 = vst [vmem:[#allocation9] sm:$0xff] %v162
    $region41: #{tpu_custom_call.1} parent=1 // pred_fallthru
      _
    // Predicated region
    $region42: #{tpu_custom_call.1} parent=1 // pred_check
      _
    $region43: #{tpu_custom_call.1} parent=1 // pred_check_branch
      %165 = sbr.rel (0) target = $region45
    $region44: #{tpu_custom_call.1} parent=1 // pred_region
      %167 = vsyncadd [#allocation5], 0
      %s169 = sshll.u32 [#allocation9], 4
      %s170 = int_to_ptr.vmem [resolvable:$true] %s169
      %s171 = sshll.u32 %s5, 4
      %s172 = int_to_ptr.hbm [resolvable:$true] %s171
      %174 = dma.vmem_to_hbm [thread:$0]  %s170, 128, %s172, [#allocation5]
    $region45: #{tpu_custom_call.1} parent=1 // pred_fallthru
      _
    // Predicated region
    $region46: #{tpu_custom_call.1} parent=1 // pred_check
      _
    $region47: #{tpu_custom_call.1} parent=1 // pred_check_branch
      %176 = sbr.rel (0) target = $region49
    $region48: #{tpu_custom_call.1} parent=1 // pred_region
      %178 = dma.done [#allocation5], 128
    $region49: #{tpu_custom_call.1} parent=1 // pred_fallthru
      _
    %179 = vsyncpa [#allocation4], 1
    %180 = vsyncpa [#allocation7], 1
    %181 = vsyncpa [#allocation5], 1

</llo_original>
